<compile_context>
chip_gen: v5e
topology: v5e:2x2
jax: 0.10.0
libtpu: 0.0.40
codegen_flags: <defaults>
</compile_context>

<pallas_src>
import jax
import jax.numpy as jnp
from jax.experimental import pallas as pl
from jax.experimental.pallas import tpu as pltpu


# --------------------------------------------------------------------------- #
# Kernel
# --------------------------------------------------------------------------- #
def resblock_kernel(x_ref, w1_ref, w2_ref, sb1_ref, sb2_ref, o_ref):
    # x_ref, o_ref: (Bt, H, WC) lane-dense activations, WC = W*C (multiple of 128)
    # w*_ref:       (3*WC, WC) block-Toeplitz im2col conv matrices
    # sb*_ref:      (2, WC) folded BN scale/bias (f32)
    Bt, H, WC = x_ref.shape
    cdt = x_ref.dtype

    def patches_3x3(inp):
        # Build the (Bt*H, 3*WC) im2col slab entirely in registers: the 3 row
        # taps are +/-1 sublane shifts against a zero halo row (no scratch
        # staging store/reload); the 3 column taps are folded into the
        # block-Toeplitz weight, so one MXU matmul covers the whole 3x3 conv.
        zero = jnp.zeros((Bt, 1, WC), cdt)
        up = jnp.concatenate([zero, inp[:, :H - 1, :]], axis=1)   # rows h-1
        dn = jnp.concatenate([inp[:, 1:, :], zero], axis=1)       # rows h+1
        return jnp.concatenate([up, inp, dn], axis=2).reshape(Bt * H, 3 * WC)

    def conv_bn(inp, w_ref, sb_ref):
        acc = jnp.dot(patches_3x3(inp), w_ref[...],
                      preferred_element_type=jnp.float32)         # (Bt*H, WC) f32
        sb = sb_ref[...]
        return acc * sb[0:1, :] + sb[1:2, :]                      # folded BN, f32

    x = x_ref[...]
    y1 = jnp.maximum(conv_bn(x, w1_ref, sb1_ref), 0.0)
    y2 = conv_bn(y1.astype(cdt).reshape(Bt, H, WC), w2_ref, sb2_ref)
    out = jnp.maximum(y2 + x.reshape(Bt * H, WC).astype(jnp.float32), 0.0)
    o_ref[...] = out.reshape(Bt, H, WC).astype(o_ref.dtype)


# --------------------------------------------------------------------------- #
# Parameter preparation (fold BN, build block-Toeplitz conv matrices) — done
# once, hoisted out of the per-call path.
# --------------------------------------------------------------------------- #
def _fold_bn(conv_bias, bn, W, eps):
    gamma, beta, mean, var = bn
    s = gamma / jnp.sqrt(var + eps)
    t = conv_bias * s + beta - mean * s
    # Tile per-channel scale/bias across W so it lines up with the (W*C) lane
    # axis (lane j = w*C + c).
    return jnp.stack([jnp.tile(s, W), jnp.tile(t, W)], 0).astype(jnp.float32)


def _conv_to_toeplitz(w_oihw, W, compute_dtype):
    # (Cout,Cin,3,3) -> block-Toeplitz (3*W*C, W*C): a 3x3 SAME conv over the
    # lane-dense (H, W*C) layout becomes one matmul over the 3 row taps.
    C = w_oihw.shape[1]
    WC = W * C
    wt = jnp.transpose(w_oihw, (2, 3, 1, 0))            # (dy, dx, ci, co)
    wp = jnp.arange(W)[:, None]                         # source column w'
    wo = jnp.arange(W)[None, :]                         # output column w
    dx = wp - wo + 1                                     # (W, W)
    valid = (dx >= 0) & (dx < 3)
    blocks = wt[:, jnp.clip(dx, 0, 2)]                   # (3, W, W, Cin, Cout)
    blocks = blocks * valid[None, :, :, None, None]
    mat = jnp.transpose(blocks, (0, 1, 3, 2, 4))         # (dy, w', ci, w, co)
    return mat.reshape(3 * WC, WC).astype(compute_dtype)


def prepare_resblock_params(w1, b1, bn1, w2, b2, bn2, W, eps=1e-5,
                            compute_dtype=jnp.bfloat16):
    return (_conv_to_toeplitz(w1, W, compute_dtype),
            _conv_to_toeplitz(w2, W, compute_dtype),
            _fold_bn(b1, bn1, W, eps),
            _fold_bn(b2, bn2, W, eps))


# --------------------------------------------------------------------------- #
# Pallas call wrappers
# --------------------------------------------------------------------------- #
def _pick_btile(n, btile_max=8):
    # Largest divisor of n that is <= btile_max: packs the batch into the
    # matmul M dimension (M = btile*H) to fill the MXU and amortize per-step
    # overhead.  For v7x with large N, callers may prefer a btile that keeps
    # the grid length a multiple of 2 so both TensorCores stay fed.
    b = 1
    for d in range(1, min(n, btile_max) + 1):
        if n % d == 0:
            b = d
    return b


def resblock_lane_dense(x_ld, params, *, btile=None, out_dtype=None):
    """Fused ResBlock on lane-dense activations.

    x_ld: (N, H, W*C) activations already in compute dtype (bf16 recommended).
    params: (w1_mat, w2_mat, sb1, sb2) from prepare_resblock_params.
    Returns (N, H, W*C) in out_dtype (default: same dtype as x_ld).  Chain
    ResBlocks in this layout so NCHW transposes/casts are paid once, not per
    block.
    """
    w1_mat, w2_mat, sb1, sb2 = params
    N, H, WC = x_ld.shape
    KC = w1_mat.shape[0]                    # 3 * WC
    out_dtype = x_ld.dtype if out_dtype is None else out_dtype
    bt = _pick_btile(N) if btile is None else btile
    assert N % bt == 0, (N, bt)

    flops = 2 * 2 * N * H * KC * WC         # two convs, 2*M*K*N each
    bytes_accessed = int(
        x_ld.size * x_ld.dtype.itemsize
        + N * H * WC * jnp.dtype(out_dtype).itemsize
        + (w1_mat.size + w2_mat.size) * w1_mat.dtype.itemsize
        + (sb1.size + sb2.size) * 4)

    return pl.pallas_call(
        resblock_kernel,
        out_shape=jax.ShapeDtypeStruct((N, H, WC), out_dtype),
        grid_spec=pltpu.PrefetchScalarGridSpec(
            num_scalar_prefetch=0,
            grid=(N // bt,),
            in_specs=[
                pl.BlockSpec((bt, H, WC), lambda n: (n, 0, 0)),
                # TODO(synk): when WC grows, single-buffer these constant
                # blocks (pipeline_mode=pl.Buffered(1)) to halve weight VMEM.
                pl.BlockSpec((KC, WC), lambda n: (0, 0)),
                pl.BlockSpec((KC, WC), lambda n: (0, 0)),
                pl.BlockSpec((2, WC), lambda n: (0, 0)),
                pl.BlockSpec((2, WC), lambda n: (0, 0)),
            ],
            out_specs=pl.BlockSpec((bt, H, WC), lambda n: (n, 0, 0)),
        ),
        compiler_params=pltpu.CompilerParams(
            dimension_semantics=("parallel",)),
        cost_estimate=pl.CostEstimate(
            flops=flops, transcendentals=0, bytes_accessed=bytes_accessed),
    )(x_ld, w1_mat, w2_mat, sb1, sb2)


def nchw_to_lane_dense(x_nchw, compute_dtype=jnp.bfloat16):
    N, C, H, W = x_nchw.shape
    return (jnp.transpose(x_nchw, (0, 2, 3, 1))
            .reshape(N, H, W * C).astype(compute_dtype))


def lane_dense_to_nchw(x_ld, C):
    N, H, WC = x_ld.shape
    return jnp.transpose(x_ld.reshape(N, H, WC // C, C), (0, 3, 1, 2))


def resblock_pallas(x_nchw, w1, b1, bn1, w2, b2, bn2, eps=1e-5,
                    compute_dtype=jnp.bfloat16, out_dtype=None, btile=None):
    """NCHW convenience wrapper (PyTorch-parity entry point).

    x_nchw: (N, C, H, W).  w*: (Cout, Cin, 3, 3).  b*: (C,).
    bn* = (gamma, beta, running_mean, running_var), each (C,).
    For chained blocks prefer resblock_lane_dense to avoid per-block
    transposes/casts.
    """
    N, C, H, W = x_nchw.shape
    params = prepare_resblock_params(w1, b1, bn1, w2, b2, bn2, W, eps,
                                     compute_dtype)
    x_ld = nchw_to_lane_dense(x_nchw, compute_dtype)
    y_ld = resblock_lane_dense(x_ld, params, btile=btile, out_dtype=out_dtype)
    return lane_dense_to_nchw(y_ld, C)


# --------------------------------------------------------------------------- #
# Pure-JAX reference (eval-mode BN), mirrors the PyTorch forward.
# --------------------------------------------------------------------------- #
def resblock_reference(x, w1, b1, bn1, w2, b2, bn2, eps=1e-5):
    def conv(x, w, b):
        y = jax.lax.conv_general_dilated(
            x, w, window_strides=(1, 1), padding=((1, 1), (1, 1)),
            dimension_numbers=("NCHW", "OIHW", "NCHW"))
        return y + b[None, :, None, None]

    def bn(x, p):
        gamma, beta, mean, var = p
        s = gamma / jnp.sqrt(var + eps)
        return x * s[None, :, None, None] + (beta - mean * s)[None, :, None, None]

    residual = x
    y = jax.nn.relu(bn(conv(x, w1, b1), bn1))
    y = bn(conv(y, w2, b2), bn2)
    return jax.nn.relu(y + residual)


# --------------------------------------------------------------------------- #
# Test
# --------------------------------------------------------------------------- #
if __name__ == "__main__":
    N, C, H, W = 2, 8, 16, 16   # hidden_dim = 8; W*C = 128 -> lane-dense
    key = jax.random.PRNGKey(0)
    ks = jax.random.split(key, 12)

    x = jax.random.normal(ks[0], (N, C, H, W), jnp.float32)

    # Conv params (PyTorch shapes: (Cout, Cin, kh, kw))
    w1 = 0.1 * jax.random.normal(ks[1], (C, C, 3, 3), jnp.float32)
    b1 = 0.05 * jax.random.normal(ks[2], (C,), jnp.float32)
    w2 = 0.1 * jax.random.normal(ks[3], (C, C, 3, 3), jnp.float32)
    b2 = 0.05 * jax.random.normal(ks[4], (C,), jnp.float32)

    # BatchNorm params (gamma, beta, running_mean, running_var)
    bn1 = (1.0 + 0.1 * jax.random.normal(ks[5], (C,), jnp.float32),
           0.1 * jax.random.normal(ks[6], (C,), jnp.float32),
           0.1 * jax.random.normal(ks[7], (C,), jnp.float32),
           1.0 + 0.1 * jax.random.uniform(ks[8], (C,), jnp.float32))
    bn2 = (1.0 + 0.1 * jax.random.normal(ks[9], (C,), jnp.float32),
           0.1 * jax.random.normal(ks[10], (C,), jnp.float32),
           0.1 * jax.random.normal(ks[11], (C,), jnp.float32),
           1.0 + 0.1 * jax.random.uniform(ks[0], (C,), jnp.float32))

    ref = resblock_reference(x, w1, b1, bn1, w2, b2, bn2)

    # f32 path: tight tolerance check of the algorithm (Toeplitz/im2col/BN fold).
    out_f32 = jax.block_until_ready(
        resblock_pallas(x, w1, b1, bn1, w2, b2, bn2,
                        compute_dtype=jnp.float32))
    assert out_f32.shape == (N, C, H, W)
    assert out_f32.dtype == jnp.float32
    assert jnp.allclose(out_f32, ref, atol=1e-3, rtol=1e-3), (
        float(jnp.max(jnp.abs(out_f32 - ref))))

    # bf16 MXU path (default): bf16 activations/weights/output, f32 accumulate.
    out_bf16 = jax.block_until_ready(
        resblock_pallas(x, w1, b1, bn1, w2, b2, bn2,
                        compute_dtype=jnp.bfloat16))
    assert out_bf16.shape == (N, C, H, W)
    assert out_bf16.dtype == jnp.bfloat16
    assert jnp.allclose(out_bf16.astype(jnp.float32), ref,
                        atol=7.5e-2, rtol=7.5e-2), (
        float(jnp.max(jnp.abs(out_bf16.astype(jnp.float32) - ref))))

    # Chained usage: stay lane-dense bf16 between blocks so the NCHW
    # transposes / f32<->bf16 casts are hoisted out of the per-block path.
    params = prepare_resblock_params(w1, b1, bn1, w2, b2, bn2, W,
                                     compute_dtype=jnp.bfloat16)
    x_ld = nchw_to_lane_dense(x, jnp.bfloat16)
    y_ld = resblock_lane_dense(x_ld, params)          # block 1, bf16 in/out
    y_ld = resblock_lane_dense(y_ld, params)          # block 2, no relayout
    y_ld = jax.block_until_ready(y_ld)
    assert y_ld.shape == (N, H, W * C) and y_ld.dtype == jnp.bfloat16
    assert bool(jnp.all(jnp.isfinite(y_ld.astype(jnp.float32))))

    print("KERNEL_OK")
</pallas_src>

<mosaic_0001>
module attributes {stable_mosaic.version = 11 : i64} {
  func.func @resblock_kernel(%arg0: i32, %arg1: memref<2x16x128xf32, #tpu.memory_space<vmem>>, %arg2: memref<384x128xf32, #tpu.memory_space<vmem>>, %arg3: memref<384x128xf32, #tpu.memory_space<vmem>>, %arg4: memref<2x128xf32, #tpu.memory_space<vmem>>, %arg5: memref<2x128xf32, #tpu.memory_space<vmem>>, %arg6: memref<2x16x128xf32, #tpu.memory_space<vmem>>) attributes {dimension_semantics = [#tpu.dimension_semantics<parallel>], iteration_bounds = array<i64: 1>, scalar_prefetch = 0 : i64, scratch_operands = 0 : i64, tpu.core_type = #tpu.core_type<tc>, window_params = [{transform_indices = @transform_0, window_bounds = array<i64: 2, 16, 128>}, {pipeline_mode = #tpu.pipeline_mode<synchronous>, transform_indices = @transform_1, window_bounds = array<i64: 384, 128>}, {pipeline_mode = #tpu.pipeline_mode<synchronous>, transform_indices = @transform_2, window_bounds = array<i64: 384, 128>}, {pipeline_mode = #tpu.pipeline_mode<synchronous>, transform_indices = @transform_3, window_bounds = array<i64: 2, 128>}, {pipeline_mode = #tpu.pipeline_mode<synchronous>, transform_indices = @transform_4, window_bounds = array<i64: 2, 128>}, {transform_indices = @transform_5, window_bounds = array<i64: 2, 16, 128>}]} {
    %c0 = arith.constant 0 : index
    %c0_0 = arith.constant 0 : index
    %c0_1 = arith.constant 0 : index
    %0 = vector.load %arg1[%c0, %c0_0, %c0_1] : memref<2x16x128xf32, #tpu.memory_space<vmem>>, vector<2x16x128xf32>
    %cst = arith.constant 0.000000e+00 : f32
    %1 = vector.broadcast %cst : f32 to vector<2x1x128xf32>
    %2 = vector.extract_strided_slice %0 {offsets = [0, 0, 0], sizes = [2, 15, 128], strides = [1, 1, 1]} : vector<2x16x128xf32> to vector<2x15x128xf32>
    %3 = tpu.concatenate %1, %2 in 1 : vector<2x1x128xf32>, vector<2x15x128xf32> -> vector<2x16x128xf32>
    %4 = vector.extract_strided_slice %0 {offsets = [0, 1, 0], sizes = [2, 15, 128], strides = [1, 1, 1]} : vector<2x16x128xf32> to vector<2x15x128xf32>
    %5 = tpu.concatenate %4, %1 in 1 : vector<2x15x128xf32>, vector<2x1x128xf32> -> vector<2x16x128xf32>
    %6 = tpu.concatenate %3, %0, %5 in 2 : vector<2x16x128xf32>, vector<2x16x128xf32>, vector<2x16x128xf32> -> vector<2x16x384xf32>
    %7 = vector.shape_cast %6 : vector<2x16x384xf32> to vector<32x384xf32>
    %c0_2 = arith.constant 0 : index
    %c0_3 = arith.constant 0 : index
    %8 = vector.load %arg2[%c0_2, %c0_3] : memref<384x128xf32, #tpu.memory_space<vmem>>, vector<384x128xf32>
    %cst_4 = arith.constant dense<0.000000e+00> : vector<32x128xf32>
    %9 = tpu.matmul %7, %8, %cst_4 {dimension_numbers = #tpu.dot_dimension_numbers<[1], [0], [0], [1], [0, 0, 1, 1], [], []>} : vector<32x384xf32>, vector<384x128xf32>, vector<32x128xf32> -> vector<32x128xf32>
    %c0_5 = arith.constant 0 : index
    %c0_6 = arith.constant 0 : index
    %10 = vector.load %arg4[%c0_5, %c0_6] : memref<2x128xf32, #tpu.memory_space<vmem>>, vector<2x128xf32>
    %11 = vector.extract_strided_slice %10 {offsets = [0, 0], sizes = [1, 128], strides = [1, 1]} : vector<2x128xf32> to vector<1x128xf32>
    %12 = vector.broadcast %11 : vector<1x128xf32> to vector<32x128xf32>
    %13 = arith.mulf %9, %12 : vector<32x128xf32>
    %14 = vector.extract_strided_slice %10 {offsets = [1, 0], sizes = [1, 128], strides = [1, 1]} : vector<2x128xf32> to vector<1x128xf32>
    %15 = vector.broadcast %14 : vector<1x128xf32> to vector<32x128xf32>
    %16 = arith.addf %13, %15 : vector<32x128xf32>
    %cst_7 = arith.constant 0.000000e+00 : f32
    %17 = vector.broadcast %cst_7 : f32 to vector<32x128xf32>
    %18 = arith.maximumf %16, %17 : vector<32x128xf32>
    %19 = vector.shape_cast %18 : vector<32x128xf32> to vector<2x16x128xf32>
    %cst_8 = arith.constant 0.000000e+00 : f32
    %20 = vector.broadcast %cst_8 : f32 to vector<2x1x128xf32>
    %21 = vector.extract_strided_slice %19 {offsets = [0, 0, 0], sizes = [2, 15, 128], strides = [1, 1, 1]} : vector<2x16x128xf32> to vector<2x15x128xf32>
    %22 = tpu.concatenate %20, %21 in 1 : vector<2x1x128xf32>, vector<2x15x128xf32> -> vector<2x16x128xf32>
    %23 = vector.extract_strided_slice %19 {offsets = [0, 1, 0], sizes = [2, 15, 128], strides = [1, 1, 1]} : vector<2x16x128xf32> to vector<2x15x128xf32>
    %24 = tpu.concatenate %23, %20 in 1 : vector<2x15x128xf32>, vector<2x1x128xf32> -> vector<2x16x128xf32>
    %25 = tpu.concatenate %22, %19, %24 in 2 : vector<2x16x128xf32>, vector<2x16x128xf32>, vector<2x16x128xf32> -> vector<2x16x384xf32>
    %26 = vector.shape_cast %25 : vector<2x16x384xf32> to vector<32x384xf32>
    %c0_9 = arith.constant 0 : index
    %c0_10 = arith.constant 0 : index
    %27 = vector.load %arg3[%c0_9, %c0_10] : memref<384x128xf32, #tpu.memory_space<vmem>>, vector<384x128xf32>
    %cst_11 = arith.constant dense<0.000000e+00> : vector<32x128xf32>
    %28 = tpu.matmul %26, %27, %cst_11 {dimension_numbers = #tpu.dot_dimension_numbers<[1], [0], [0], [1], [0, 0, 1, 1], [], []>} : vector<32x384xf32>, vector<384x128xf32>, vector<32x128xf32> -> vector<32x128xf32>
    %c0_12 = arith.constant 0 : index
    %c0_13 = arith.constant 0 : index
    %29 = vector.load %arg5[%c0_12, %c0_13] : memref<2x128xf32, #tpu.memory_space<vmem>>, vector<2x128xf32>
    %30 = vector.extract_strided_slice %29 {offsets = [0, 0], sizes = [1, 128], strides = [1, 1]} : vector<2x128xf32> to vector<1x128xf32>
    %31 = vector.broadcast %30 : vector<1x128xf32> to vector<32x128xf32>
    %32 = arith.mulf %28, %31 : vector<32x128xf32>
    %33 = vector.extract_strided_slice %29 {offsets = [1, 0], sizes = [1, 128], strides = [1, 1]} : vector<2x128xf32> to vector<1x128xf32>
    %34 = vector.broadcast %33 : vector<1x128xf32> to vector<32x128xf32>
    %35 = arith.addf %32, %34 : vector<32x128xf32>
    %36 = vector.shape_cast %0 : vector<2x16x128xf32> to vector<32x128xf32>
    %37 = arith.addf %35, %36 : vector<32x128xf32>
    %cst_14 = arith.constant 0.000000e+00 : f32
    %38 = vector.broadcast %cst_14 : f32 to vector<32x128xf32>
    %39 = arith.maximumf %37, %38 : vector<32x128xf32>
    %40 = vector.shape_cast %39 : vector<32x128xf32> to vector<2x16x128xf32>
    %c0_15 = arith.constant 0 : index
    %c0_16 = arith.constant 0 : index
    %c0_17 = arith.constant 0 : index
    %41 = vector.load %arg6[%c0_15, %c0_16, %c0_17] : memref<2x16x128xf32, #tpu.memory_space<vmem>>, vector<2x16x128xf32>
    tpu.vector_store %arg6[%c0_15, %c0_16, %c0_17], %40 {strides = array<i32>} : memref<2x16x128xf32, #tpu.memory_space<vmem>>, vector<2x16x128xf32>,
    return
  }
  func.func @transform_0(%arg0: i32) -> (i32, i32, i32) {
    %c0_i32 = arith.constant 0 : i32
    %c0_i32_0 = arith.constant 0 : i32
    %c0_i32_1 = arith.constant 0 : i32
    return %arg0, %c0_i32, %c0_i32_0 : i32, i32, i32
  }
  func.func @transform_1(%arg0: i32) -> (i32, i32) {
    %c0_i32 = arith.constant 0 : i32
    %c0_i32_0 = arith.constant 0 : i32
    %c0_i32_1 = arith.constant 0 : i32
    return %c0_i32, %c0_i32_0 : i32, i32
  }
  func.func @transform_2(%arg0: i32) -> (i32, i32) {
    %c0_i32 = arith.constant 0 : i32
    %c0_i32_0 = arith.constant 0 : i32
    %c0_i32_1 = arith.constant 0 : i32
    return %c0_i32, %c0_i32_0 : i32, i32
  }
  func.func @transform_3(%arg0: i32) -> (i32, i32) {
    %c0_i32 = arith.constant 0 : i32
    %c0_i32_0 = arith.constant 0 : i32
    %c0_i32_1 = arith.constant 0 : i32
    return %c0_i32, %c0_i32_0 : i32, i32
  }
  func.func @transform_4(%arg0: i32) -> (i32, i32) {
    %c0_i32 = arith.constant 0 : i32
    %c0_i32_0 = arith.constant 0 : i32
    %c0_i32_1 = arith.constant 0 : i32
    return %c0_i32, %c0_i32_0 : i32, i32
  }
  func.func @transform_5(%arg0: i32) -> (i32, i32, i32) {
    %c0_i32 = arith.constant 0 : i32
    %c0_i32_0 = arith.constant 0 : i32
    %c0_i32_1 = arith.constant 0 : i32
    return %arg0, %c0_i32, %c0_i32_0 : i32, i32, i32
  }
}

</mosaic_0001>

<llo_original>
// kernel: tpu_custom_call.1
$region0: #{tpu_custom_call.1}
  #allocation0 [shape = 'u32[]', space=smem, size = 0x4, offset = 0x4, fixed_abs, tag = 'smem constant byte address 0x4 - core index']
  #allocation1 [shape = 'u32[72,128]{1,0:T(1,128)}', space=vmem, size = 0x9000, scoped, tag = 'internal scratch']
  %s0 = inlined_call_operand.hbm [shape: f32[2,16,128], index: 0, kind: input, shape index: {}]
  %s1 = inlined_call_operand.hbm [shape: f32[384,128], index: 1, kind: input, shape index: {}]
  %s2 = inlined_call_operand.hbm [shape: f32[384,128], index: 2, kind: input, shape index: {}]
  %s3 = inlined_call_operand.vmem [shape: f32[2,128], index: 3, kind: input, shape index: {}]
  %s4 = inlined_call_operand.hbm [shape: f32[2,128], index: 4, kind: input, shape index: {}]
  %s5 = inlined_call_operand.hbm [shape: f32[2,16,128], index: 5, kind: output, shape index: {}]
  %s6 = sld [smem:[#allocation0]]
  $region46: #{tpu_custom_call.1} parent=0
    _
  %s8 = ssub.s32 1, %s6
  %s9 = scalar_select 0, %s8, %s6
  $region1: #{tpu_custom_call.1} parent=0
    #allocation2 [shape = 'u8[16384]{0}', space=vmem, size = 0x4000, scoped, tag = 'input window, operand 0, single buffered']
    #allocation3 [shape = 's32[1]{0}', space=sflag, size = 0x4, scoped, tag = 'scoped memory for tpu_custom_call.1']
    #allocation4 [shape = 's32[1]{0}', space=sflag, size = 0x4, scoped, tag = 'scoped memory for tpu_custom_call.1']
    #allocation5 [shape = 'u8[196608]{0}', space=vmem, size = 0x30000, scoped, tag = 'input window, operand 1, single buffered']
    #allocation6 [shape = 's32[1]{0}', space=sflag, size = 0x4, scoped, tag = 'scoped memory for tpu_custom_call.1']
    #allocation7 [shape = 'u8[196608]{0}', space=vmem, size = 0x30000, scoped, tag = 'input window, operand 2, single buffered']
    #allocation8 [shape = 'u8[1024]{0}', space=vmem, size = 0x400, scoped, tag = 'input window, operand 4, single buffered']
    #allocation9 [shape = 's32[1]{0}', space=sflag, size = 0x4, scoped, tag = 'scoped memory for tpu_custom_call.1']
    #allocation10 [shape = 'u8[16384]{0}', space=vmem, size = 0x4000, scoped, tag = 'output window, operand 0, single buffered']
    %10 = vsyncpa [#allocation3], 0
    %11 = vsyncpa [#allocation6], 0
    %12 = vsyncpa [#allocation9], 0
    %13 = vsyncpa [#allocation4], 0
    // Predicated region
    $region2: #{tpu_custom_call.1} parent=1 // pred_check
      _
    $region3: #{tpu_custom_call.1} parent=1 // pred_check_branch
      %15 = sbr.rel (0) target = $region5
    $region4: #{tpu_custom_call.1} parent=1 // pred_region
      %17 = vsyncadd [#allocation3], 0
      %s18 = sshll.u32 %s0, 4
      %s19 = int_to_ptr.hbm [resolvable:$true] %s18
      %s20 = sshll.u32 [#allocation2], 4
      %s21 = int_to_ptr.vmem [resolvable:$true] %s20
      %26 = dma.hbm_to_vmem [thread:$0]  %s19, 512, %s21, [#allocation3], 128, 128, 8
    $region5: #{tpu_custom_call.1} parent=1 // pred_fallthru
      _
    // Predicated region
    $region6: #{tpu_custom_call.1} parent=1 // pred_check
      _
    $region7: #{tpu_custom_call.1} parent=1 // pred_check_branch
      %28 = sbr.rel (0) target = $region9
    $region8: #{tpu_custom_call.1} parent=1 // pred_region
      %30 = vsyncadd [#allocation6], 0
      %s31 = sshll.u32 %s1, 4
      %s32 = int_to_ptr.hbm [resolvable:$true] %s31
      %s33 = sshll.u32 [#allocation5], 4
      %s34 = int_to_ptr.vmem [resolvable:$true] %s33
      %39 = dma.hbm_to_vmem [thread:$0]  %s32, 6144, %s34, [#allocation6], 128, 128, 8
    $region9: #{tpu_custom_call.1} parent=1 // pred_fallthru
      _
    // Predicated region
    $region10: #{tpu_custom_call.1} parent=1 // pred_check
      _
    $region11: #{tpu_custom_call.1} parent=1 // pred_check_branch
      %41 = sbr.rel (0) target = $region13
    $region12: #{tpu_custom_call.1} parent=1 // pred_region
      %43 = vsyncadd [#allocation6], 0
      %s44 = sshll.u32 %s2, 4
      %s45 = int_to_ptr.hbm [resolvable:$true] %s44
      %s46 = sshll.u32 [#allocation7], 4
      %s47 = int_to_ptr.vmem [resolvable:$true] %s46
      %52 = dma.hbm_to_vmem [thread:$0]  %s45, 6144, %s47, [#allocation6], 128, 128, 8
    $region13: #{tpu_custom_call.1} parent=1 // pred_fallthru
      _
    // Predicated region
    $region14: #{tpu_custom_call.1} parent=1 // pred_check
      _
    $region15: #{tpu_custom_call.1} parent=1 // pred_check_branch
      %54 = sbr.rel (0) target = $region17
    $region16: #{tpu_custom_call.1} parent=1 // pred_region
      _
    $region17: #{tpu_custom_call.1} parent=1 // pred_fallthru
      _
    // Predicated region
    $region18: #{tpu_custom_call.1} parent=1 // pred_check
      _
    $region19: #{tpu_custom_call.1} parent=1 // pred_check_branch
      %56 = sbr.rel (0) target = $region21
    $region20: #{tpu_custom_call.1} parent=1 // pred_region
      %58 = vsyncadd [#allocation9], 0
      %s60 = sshll.u32 %s4, 4
      %s61 = int_to_ptr.hbm [resolvable:$true] %s60
      %s62 = sshll.u32 [#allocation8], 4
      %s63 = int_to_ptr.vmem [resolvable:$true] %s62
      %65 = dma.hbm_to_vmem [thread:$0]  %s61, 32, %s63, [#allocation9]
    $region21: #{tpu_custom_call.1} parent=1 // pred_fallthru
      _
    // Predicated region
    $region22: #{tpu_custom_call.1} parent=1 // pred_check
      _
    $region23: #{tpu_custom_call.1} parent=1 // pred_check_branch
      %67 = sbr.rel (0) target = $region25
    $region24: #{tpu_custom_call.1} parent=1 // pred_region
      %69 = dma.done [#allocation3], 512
    $region25: #{tpu_custom_call.1} parent=1 // pred_fallthru
      _
    // Predicated region
    $region26: #{tpu_custom_call.1} parent=1 // pred_check
      _
    $region27: #{tpu_custom_call.1} parent=1 // pred_check_branch
      %71 = sbr.rel (0) target = $region29
    $region28: #{tpu_custom_call.1} parent=1 // pred_region
      %73 = dma.done [#allocation6], 6144
    $region29: #{tpu_custom_call.1} parent=1 // pred_fallthru
      _
    // Predicated region
    $region30: #{tpu_custom_call.1} parent=1 // pred_check
      _
    $region31: #{tpu_custom_call.1} parent=1 // pred_check_branch
      %75 = sbr.rel (0) target = $region33
    $region32: #{tpu_custom_call.1} parent=1 // pred_region
      %77 = dma.done [#allocation6], 6144
    $region33: #{tpu_custom_call.1} parent=1 // pred_fallthru
      _
    // Predicated region
    $region34: #{tpu_custom_call.1} parent=1 // pred_check
      _
    $region35: #{tpu_custom_call.1} parent=1 // pred_check_branch
      %79 = sbr.rel (0) target = $region37
    $region36: #{tpu_custom_call.1} parent=1 // pred_region
      %81 = dma.done [#allocation9], 32
    $region37: #{tpu_custom_call.1} parent=1 // pred_fallthru
      _
    %v82 = vld [vmem:[#allocation2] sm:$0xff]
    %v83 = vld [vmem:[#allocation2 + $0x8] sm:$0xff]
    %v84 = vld [vmem:[#allocation2 + $0x10] sm:$0xff]
    %v85 = vld [vmem:[#allocation2 + $0x18] sm:$0xff]
    %vm90 = vcmask 1040384
    %v91 = vrot.slane %v82, 7
    %v92 = vrot.slane %v83, 7
    %v93 = vsel %vm90, %v91, %v92
    %v94 = vrot.slane %v84, 7
    %v95 = vrot.slane %v85, 7
    %v96 = vsel %vm90, %v94, %v95
    %v101 = vsel %vm90, 0.0, %v91
    %v102 = vsel %vm90, 0.0, %v94
    %vm103 = vcmask 1046528
    %v104 = vrot.slane %v82, 1
    %v105 = vrot.slane %v83, 1
    %v106 = vsel %vm103, %v104, %v105
    %v107 = vrot.slane %v84, 1
    %v108 = vrot.slane %v85, 1
    %v109 = vsel %vm103, %v107, %v108
    %v114 = vsel %vm103, %v105, 0.0
    %v115 = vsel %vm103, %v108, 0.0
    %v116 = vld [vmem:[#allocation5] sm:$0xff]
    %v117 = vld [vmem:[#allocation5 + $0x8] sm:$0xff]
    %v118 = vld [vmem:[#allocation5 + $0x10] sm:$0xff]
    %v119 = vld [vmem:[#allocation5 + $0x18] sm:$0xff]
    %v120 = vld [vmem:[#allocation5 + $0x20] sm:$0xff]
    %v121 = vld [vmem:[#allocation5 + $0x28] sm:$0xff]
    %v122 = vld [vmem:[#allocation5 + $0x30] sm:$0xff]
    %v123 = vld [vmem:[#allocation5 + $0x38] sm:$0xff]
    %v124 = vld [vmem:[#allocation5 + $0x40] sm:$0xff]
    %v125 = vld [vmem:[#allocation5 + $0x48] sm:$0xff]
    %v126 = vld [vmem:[#allocation5 + $0x50] sm:$0xff]
    %v127 = vld [vmem:[#allocation5 + $0x58] sm:$0xff]
    %v128 = vld [vmem:[#allocation5 + $0x60] sm:$0xff]
    %v129 = vld [vmem:[#allocation5 + $0x68] sm:$0xff]
    %v130 = vld [vmem:[#allocation5 + $0x70] sm:$0xff]
    %v131 = vld [vmem:[#allocation5 + $0x78] sm:$0xff]
    %v132 = vld [vmem:[#allocation5 + $0x80] sm:$0xff]
    %v133 = vld [vmem:[#allocation5 + $0x88] sm:$0xff]
    %v134 = vld [vmem:[#allocation5 + $0x90] sm:$0xff]
    %v135 = vld [vmem:[#allocation5 + $0x98] sm:$0xff]
    %v136 = vld [vmem:[#allocation5 + $0xa0] sm:$0xff]
    %v137 = vld [vmem:[#allocation5 + $0xa8] sm:$0xff]
    %v138 = vld [vmem:[#allocation5 + $0xb0] sm:$0xff]
    %v139 = vld [vmem:[#allocation5 + $0xb8] sm:$0xff]
    %v140 = vld [vmem:[#allocation5 + $0xc0] sm:$0xff]
    %v141 = vld [vmem:[#allocation5 + $0xc8] sm:$0xff]
    %v142 = vld [vmem:[#allocation5 + $0xd0] sm:$0xff]
    %v143 = vld [vmem:[#allocation5 + $0xd8] sm:$0xff]
    %v144 = vld [vmem:[#allocation5 + $0xe0] sm:$0xff]
    %v145 = vld [vmem:[#allocation5 + $0xe8] sm:$0xff]
    %v146 = vld [vmem:[#allocation5 + $0xf0] sm:$0xff]
    %v147 = vld [vmem:[#allocation5 + $0xf8] sm:$0xff]
    %v148 = vld [vmem:[#allocation5 + $0x100] sm:$0xff]
    %v149 = vld [vmem:[#allocation5 + $0x108] sm:$0xff]
    %v150 = vld [vmem:[#allocation5 + $0x110] sm:$0xff]
    %v151 = vld [vmem:[#allocation5 + $0x118] sm:$0xff]
    %v152 = vld [vmem:[#allocation5 + $0x120] sm:$0xff]
    %v153 = vld [vmem:[#allocation5 + $0x128] sm:$0xff]
    %v154 = vld [vmem:[#allocation5 + $0x130] sm:$0xff]
    %v155 = vld [vmem:[#allocation5 + $0x138] sm:$0xff]
    %v156 = vld [vmem:[#allocation5 + $0x140] sm:$0xff]
    %v157 = vld [vmem:[#allocation5 + $0x148] sm:$0xff]
    %v158 = vld [vmem:[#allocation5 + $0x150] sm:$0xff]
    %v159 = vld [vmem:[#allocation5 + $0x158] sm:$0xff]
    %v160 = vld [vmem:[#allocation5 + $0x160] sm:$0xff]
    %v161 = vld [vmem:[#allocation5 + $0x168] sm:$0xff]
    %v162 = vld [vmem:[#allocation5 + $0x170] sm:$0xff]
    %v163 = vld [vmem:[#allocation5 + $0x178] sm:$0xff]
    %164 = vmatpush.msra.mxu0 %v131
    %165 = vmatpush.msra.mxu0 %v130
    %166 = vmatpush.msra.mxu0 %v129
    %167 = vmatpush.msra.mxu0 %v128
    %168 = vmatpush.msra.mxu0 %v127
    %169 = vmatpush.msra.mxu0 %v126
    %170 = vmatpush.msra.mxu0 %v125
    %171 = vmatpush.msra.mxu0 %v124
    %172 = vmatpush.msra.mxu0 %v123
    %173 = vmatpush.msra.mxu0 %v122
    %174 = vmatpush.msra.mxu0 %v121
    %175 = vmatpush.msra.mxu0 %v120
    %176 = vmatpush.msra.mxu0 %v119
    %177 = vmatpush.msra.mxu0 %v118
    %178 = vmatpush.msra.mxu0 %v117
    %179 = vmatpush.msra.mxu0 %v116
    %180 = vmatmul.f32.gmra.mxu0 %v101
    %v181 = vpop.f32.mrf.mxu0
    %v182 = vadd.f32 0.0, %v181
    %183 = vmatmul.f32.gmra.mxu0 %v93
    %v184 = vpop.f32.mrf.mxu0
    %v185 = vadd.f32 0.0, %v184
    %186 = vmatmul.f32.gmra.mxu0 %v102
    %v187 = vpop.f32.mrf.mxu0
    %v188 = vadd.f32 0.0, %v187
    %189 = vmatmul.f32.gmra.mxu0 %v96
    %v190 = vpop.f32.mrf.mxu0
    %v191 = vadd.f32 0.0, %v190
    %192 = vdwg.mxu0
    %193 = vmatpush.msra.mxu0 %v147
    %194 = vmatpush.msra.mxu0 %v146
    %195 = vmatpush.msra.mxu0 %v145
    %196 = vmatpush.msra.mxu0 %v144
    %197 = vmatpush.msra.mxu0 %v143
    %198 = vmatpush.msra.mxu0 %v142
    %199 = vmatpush.msra.mxu0 %v141
    %200 = vmatpush.msra.mxu0 %v140
    %201 = vmatpush.msra.mxu0 %v139
    %202 = vmatpush.msra.mxu0 %v138
    %203 = vmatpush.msra.mxu0 %v137
    %204 = vmatpush.msra.mxu0 %v136
    %205 = vmatpush.msra.mxu0 %v135
    %206 = vmatpush.msra.mxu0 %v134
    %207 = vmatpush.msra.mxu0 %v133
    %208 = vmatpush.msra.mxu0 %v132
    %209 = vmatmul.f32.gmra.mxu0 %v82
    %v210 = vpop.f32.mrf.mxu0
    %v211 = vadd.f32 %v182, %v210
    %212 = vmatmul.f32.gmra.mxu0 %v83
    %v213 = vpop.f32.mrf.mxu0
    %v214 = vadd.f32 %v185, %v213
    %215 = vmatmul.f32.gmra.mxu0 %v84
    %v216 = vpop.f32.mrf.mxu0
    %v217 = vadd.f32 %v188, %v216
    %218 = vmatmul.f32.gmra.mxu0 %v85
    %v219 = vpop.f32.mrf.mxu0
    %v220 = vadd.f32 %v191, %v219
    %221 = vdwg.mxu0
    %222 = vmatpush.msra.mxu0 %v163
    %223 = vmatpush.msra.mxu0 %v162
    %224 = vmatpush.msra.mxu0 %v161
    %225 = vmatpush.msra.mxu0 %v160
    %226 = vmatpush.msra.mxu0 %v159
    %227 = vmatpush.msra.mxu0 %v158
    %228 = vmatpush.msra.mxu0 %v157
    %229 = vmatpush.msra.mxu0 %v156
    %230 = vmatpush.msra.mxu0 %v155
    %231 = vmatpush.msra.mxu0 %v154
    %232 = vmatpush.msra.mxu0 %v153
    %233 = vmatpush.msra.mxu0 %v152
    %234 = vmatpush.msra.mxu0 %v151
    %235 = vmatpush.msra.mxu0 %v150
    %236 = vmatpush.msra.mxu0 %v149
    %237 = vmatpush.msra.mxu0 %v148
    %238 = vmatmul.f32.gmra.mxu0 %v106
    %v239 = vpop.f32.mrf.mxu0
    %v240 = vadd.f32 %v211, %v239
    %241 = vmatmul.f32.gmra.mxu0 %v114
    %v242 = vpop.f32.mrf.mxu0
    %v243 = vadd.f32 %v214, %v242
    %244 = vmatmul.f32.gmra.mxu0 %v109
    %v245 = vpop.f32.mrf.mxu0
    %v246 = vadd.f32 %v217, %v245
    %247 = vmatmul.f32.gmra.mxu0 %v115
    %v248 = vpop.f32.mrf.mxu0
    %v249 = vadd.f32 %v220, %v248
    %250 = vdwg.mxu0
    %v251 = vld [vmem:[%s3] sm:$0x3]
    %v252 = vperm.slane %v251, 0
    %v253 = vmul.f32 %v240, %v252
    %v254 = vmul.f32 %v243, %v252
    %v255 = vmul.f32 %v246, %v252
    %v256 = vmul.f32 %v249, %v252
    %v257 = vperm.slane %v251, 1
    %v258 = vadd.f32 %v253, %v257
    %v259 = vadd.f32 %v254, %v257
    %v260 = vadd.f32 %v255, %v257
    %v261 = vadd.f32 %v256, %v257
    %v262 = vmax.f32 %v258, 0.0
    %v263 = vmax.f32 %v259, 0.0
    %v264 = vmax.f32 %v260, 0.0
    %v265 = vmax.f32 %v261, 0.0
    %v270 = vrot.slane %v262, 7
    %v271 = vrot.slane %v263, 7
    %v272 = vsel %vm90, %v270, %v271
    %v273 = vrot.slane %v264, 7
    %v274 = vrot.slane %v265, 7
    %v275 = vsel %vm90, %v273, %v274
    %v280 = vsel %vm90, 0.0, %v270
    %v281 = vsel %vm90, 0.0, %v273
    %v282 = vrot.slane %v262, 1
    %v283 = vrot.slane %v263, 1
    %v284 = vsel %vm103, %v282, %v283
    %v285 = vrot.slane %v264, 1
    %v286 = vrot.slane %v265, 1
    %v287 = vsel %vm103, %v285, %v286
    %v292 = vsel %vm103, %v283, 0.0
    %v293 = vsel %vm103, %v286, 0.0
    %v294 = vld [vmem:[#allocation7] sm:$0xff]
    %v295 = vld [vmem:[#allocation7 + $0x8] sm:$0xff]
    %v296 = vld [vmem:[#allocation7 + $0x10] sm:$0xff]
    %v297 = vld [vmem:[#allocation7 + $0x18] sm:$0xff]
    %v298 = vld [vmem:[#allocation7 + $0x20] sm:$0xff]
    %v299 = vld [vmem:[#allocation7 + $0x28] sm:$0xff]
    %v300 = vld [vmem:[#allocation7 + $0x30] sm:$0xff]
    %v301 = vld [vmem:[#allocation7 + $0x38] sm:$0xff]
    %v302 = vld [vmem:[#allocation7 + $0x40] sm:$0xff]
    %v303 = vld [vmem:[#allocation7 + $0x48] sm:$0xff]
    %v304 = vld [vmem:[#allocation7 + $0x50] sm:$0xff]
    %v305 = vld [vmem:[#allocation7 + $0x58] sm:$0xff]
    %v306 = vld [vmem:[#allocation7 + $0x60] sm:$0xff]
    %v307 = vld [vmem:[#allocation7 + $0x68] sm:$0xff]
    %v308 = vld [vmem:[#allocation7 + $0x70] sm:$0xff]
    %v309 = vld [vmem:[#allocation7 + $0x78] sm:$0xff]
    %v310 = vld [vmem:[#allocation7 + $0x80] sm:$0xff]
    %v311 = vld [vmem:[#allocation7 + $0x88] sm:$0xff]
    %v312 = vld [vmem:[#allocation7 + $0x90] sm:$0xff]
    %v313 = vld [vmem:[#allocation7 + $0x98] sm:$0xff]
    %v314 = vld [vmem:[#allocation7 + $0xa0] sm:$0xff]
    %v315 = vld [vmem:[#allocation7 + $0xa8] sm:$0xff]
    %v316 = vld [vmem:[#allocation7 + $0xb0] sm:$0xff]
    %v317 = vld [vmem:[#allocation7 + $0xb8] sm:$0xff]
    %v318 = vld [vmem:[#allocation7 + $0xc0] sm:$0xff]
    %v319 = vld [vmem:[#allocation7 + $0xc8] sm:$0xff]
    %v320 = vld [vmem:[#allocation7 + $0xd0] sm:$0xff]
    %v321 = vld [vmem:[#allocation7 + $0xd8] sm:$0xff]
    %v322 = vld [vmem:[#allocation7 + $0xe0] sm:$0xff]
    %v323 = vld [vmem:[#allocation7 + $0xe8] sm:$0xff]
    %v324 = vld [vmem:[#allocation7 + $0xf0] sm:$0xff]
    %v325 = vld [vmem:[#allocation7 + $0xf8] sm:$0xff]
    %v326 = vld [vmem:[#allocation7 + $0x100] sm:$0xff]
    %v327 = vld [vmem:[#allocation7 + $0x108] sm:$0xff]
    %v328 = vld [vmem:[#allocation7 + $0x110] sm:$0xff]
    %v329 = vld [vmem:[#allocation7 + $0x118] sm:$0xff]
    %v330 = vld [vmem:[#allocation7 + $0x120] sm:$0xff]
    %v331 = vld [vmem:[#allocation7 + $0x128] sm:$0xff]
    %v332 = vld [vmem:[#allocation7 + $0x130] sm:$0xff]
    %v333 = vld [vmem:[#allocation7 + $0x138] sm:$0xff]
    %v334 = vld [vmem:[#allocation7 + $0x140] sm:$0xff]
    %v335 = vld [vmem:[#allocation7 + $0x148] sm:$0xff]
    %v336 = vld [vmem:[#allocation7 + $0x150] sm:$0xff]
    %v337 = vld [vmem:[#allocation7 + $0x158] sm:$0xff]
    %v338 = vld [vmem:[#allocation7 + $0x160] sm:$0xff]
    %v339 = vld [vmem:[#allocation7 + $0x168] sm:$0xff]
    %v340 = vld [vmem:[#allocation7 + $0x170] sm:$0xff]
    %v341 = vld [vmem:[#allocation7 + $0x178] sm:$0xff]
    %342 = vmatpush.msra.mxu0 %v309
    %343 = vmatpush.msra.mxu0 %v308
    %344 = vmatpush.msra.mxu0 %v307
    %345 = vmatpush.msra.mxu0 %v306
    %346 = vmatpush.msra.mxu0 %v305
    %347 = vmatpush.msra.mxu0 %v304
    %348 = vmatpush.msra.mxu0 %v303
    %349 = vmatpush.msra.mxu0 %v302
    %350 = vmatpush.msra.mxu0 %v301
    %351 = vmatpush.msra.mxu0 %v300
    %352 = vmatpush.msra.mxu0 %v299
    %353 = vmatpush.msra.mxu0 %v298
    %354 = vmatpush.msra.mxu0 %v297
    %355 = vmatpush.msra.mxu0 %v296
    %356 = vmatpush.msra.mxu0 %v295
    %357 = vmatpush.msra.mxu0 %v294
    %358 = vmatmul.f32.gmra.mxu0 %v280
    %v359 = vpop.f32.mrf.mxu0
    %v360 = vadd.f32 0.0, %v359
    %361 = vmatmul.f32.gmra.mxu0 %v272
    %v362 = vpop.f32.mrf.mxu0
    %v363 = vadd.f32 0.0, %v362
    %364 = vmatmul.f32.gmra.mxu0 %v281
    %v365 = vpop.f32.mrf.mxu0
    %v366 = vadd.f32 0.0, %v365
    %367 = vmatmul.f32.gmra.mxu0 %v275
    %v368 = vpop.f32.mrf.mxu0
    %v369 = vadd.f32 0.0, %v368
    %370 = vdwg.mxu0
    %371 = vmatpush.msra.mxu0 %v325
    %372 = vmatpush.msra.mxu0 %v324
    %373 = vmatpush.msra.mxu0 %v323
    %374 = vmatpush.msra.mxu0 %v322
    %375 = vmatpush.msra.mxu0 %v321
    %376 = vmatpush.msra.mxu0 %v320
    %377 = vmatpush.msra.mxu0 %v319
    %378 = vmatpush.msra.mxu0 %v318
    %379 = vmatpush.msra.mxu0 %v317
    %380 = vmatpush.msra.mxu0 %v316
    %381 = vmatpush.msra.mxu0 %v315
    %382 = vmatpush.msra.mxu0 %v314
    %383 = vmatpush.msra.mxu0 %v313
    %384 = vmatpush.msra.mxu0 %v312
    %385 = vmatpush.msra.mxu0 %v311
    %386 = vmatpush.msra.mxu0 %v310
    %387 = vmatmul.f32.gmra.mxu0 %v262
    %v388 = vpop.f32.mrf.mxu0
    %v389 = vadd.f32 %v360, %v388
    %390 = vmatmul.f32.gmra.mxu0 %v263
    %v391 = vpop.f32.mrf.mxu0
    %v392 = vadd.f32 %v363, %v391
    %393 = vmatmul.f32.gmra.mxu0 %v264
    %v394 = vpop.f32.mrf.mxu0
    %v395 = vadd.f32 %v366, %v394
    %396 = vmatmul.f32.gmra.mxu0 %v265
    %v397 = vpop.f32.mrf.mxu0
    %v398 = vadd.f32 %v369, %v397
    %399 = vdwg.mxu0
    %400 = vmatpush.msra.mxu0 %v341
    %401 = vmatpush.msra.mxu0 %v340
    %402 = vmatpush.msra.mxu0 %v339
    %403 = vmatpush.msra.mxu0 %v338
    %404 = vmatpush.msra.mxu0 %v337
    %405 = vmatpush.msra.mxu0 %v336
    %406 = vmatpush.msra.mxu0 %v335
    %407 = vmatpush.msra.mxu0 %v334
    %408 = vmatpush.msra.mxu0 %v333
    %409 = vmatpush.msra.mxu0 %v332
    %410 = vmatpush.msra.mxu0 %v331
    %411 = vmatpush.msra.mxu0 %v330
    %412 = vmatpush.msra.mxu0 %v329
    %413 = vmatpush.msra.mxu0 %v328
    %414 = vmatpush.msra.mxu0 %v327
    %415 = vmatpush.msra.mxu0 %v326
    %416 = vmatmul.f32.gmra.mxu0 %v284
    %v417 = vpop.f32.mrf.mxu0
    %v418 = vadd.f32 %v389, %v417
    %419 = vmatmul.f32.gmra.mxu0 %v292
    %v420 = vpop.f32.mrf.mxu0
    %v421 = vadd.f32 %v392, %v420
    %422 = vmatmul.f32.gmra.mxu0 %v287
    %v423 = vpop.f32.mrf.mxu0
    %v424 = vadd.f32 %v395, %v423
    %425 = vmatmul.f32.gmra.mxu0 %v293
    %v426 = vpop.f32.mrf.mxu0
    %v427 = vadd.f32 %v398, %v426
    %428 = vdwg.mxu0
    %v429 = vld [vmem:[#allocation8] sm:$0x3]
    %v430 = vperm.slane %v429, 0
    %v431 = vmul.f32 %v418, %v430
    %v432 = vmul.f32 %v421, %v430
    %v433 = vmul.f32 %v424, %v430
    %v434 = vmul.f32 %v427, %v430
    %v435 = vperm.slane %v429, 1
    %v436 = vadd.f32 %v431, %v435
    %v437 = vadd.f32 %v432, %v435
    %v438 = vadd.f32 %v433, %v435
    %v439 = vadd.f32 %v434, %v435
    %v440 = vadd.f32 %v436, %v82
    %v441 = vadd.f32 %v437, %v83
    %v442 = vadd.f32 %v438, %v84
    %v443 = vadd.f32 %v439, %v85
    %v444 = vmax.f32 %v440, 0.0
    %v445 = vmax.f32 %v441, 0.0
    %v446 = vmax.f32 %v442, 0.0
    %v447 = vmax.f32 %v443, 0.0
    %448 = vst [vmem:[#allocation10] sm:$0xff] %v444
    %449 = vst [vmem:[#allocation10 + $0x8] sm:$0xff] %v445
    %450 = vst [vmem:[#allocation10 + $0x10] sm:$0xff] %v446
    %451 = vst [vmem:[#allocation10 + $0x18] sm:$0xff] %v447
    // Predicated region
    $region38: #{tpu_custom_call.1} parent=1 // pred_check
      _
    $region39: #{tpu_custom_call.1} parent=1 // pred_check_branch
      %453 = sbr.rel (0) target = $region41
    $region40: #{tpu_custom_call.1} parent=1 // pred_region
      %455 = vsyncadd [#allocation4], 0
      %s456 = sshll.u32 [#allocation10], 4
      %s457 = int_to_ptr.vmem [resolvable:$true] %s456
      %s458 = sshll.u32 %s5, 4
      %s459 = int_to_ptr.hbm [resolvable:$true] %s458
      %464 = dma.vmem_to_hbm [thread:$0]  %s457, 512, %s459, [#allocation4], 128, 128, 8
    $region41: #{tpu_custom_call.1} parent=1 // pred_fallthru
      _
    // Predicated region
    $region42: #{tpu_custom_call.1} parent=1 // pred_check
      _
    $region43: #{tpu_custom_call.1} parent=1 // pred_check_branch
      %466 = sbr.rel (0) target = $region45
    $region44: #{tpu_custom_call.1} parent=1 // pred_region
      %468 = dma.done [#allocation4], 512
    $region45: #{tpu_custom_call.1} parent=1 // pred_fallthru
      _
    %469 = vsyncpa [#allocation3], 1
    %470 = vsyncpa [#allocation6], 1
    %471 = vsyncpa [#allocation9], 1
    %472 = vsyncpa [#allocation4], 1

</llo_original>
